<compile_context>
chip_gen: v6e
topology: v6e:2x2x1
jax: 0.10.0
libtpu: 0.0.40
codegen_flags: <defaults>
</compile_context>

<pallas_src>
import jax
import jax.numpy as jnp
from jax.experimental import pallas as pl
from jax.experimental.pallas import tpu as pltpu

EPS = 1e-5


def _round_up(n, m):
    return ((n + m - 1) // m) * m


def _pick_tm(N, tm_max, min_tiles=2):
    """Choose a row-tile size.

    Returns (tm_eff, n_pad). Prefers a tile that divides N exactly so no
    padding / output slice (extra HBM passes) is needed. When N > tm_max we
    also guarantee at least `min_tiles` grid steps (one per v7x TensorCore).
    """
    tm_max = max(8, int(tm_max))
    if N <= tm_max:
        # One tile covering the whole array: block dim == array dim, so the
        # (8, 128) divisibility rule does not apply and no padding is needed.
        return N, N
    # Cap so the grid has at least `min_tiles` steps, rounded down to 8.
    cap = max(8, min(tm_max, N // min_tiles) // 8 * 8)
    # Largest divisor of N that is a multiple of 8 and <= cap -> no padding.
    for t in range(cap, 7, -8):
        if N % t == 0:
            return t, N
    # Ragged N with no usable divisor: fall back to padding (extra HBM pass).
    return cap, _round_up(N, cap)


def prenorm_kernel(x_ref, w_ref, b_ref, o_ref):
    # x_ref: (tm, D) row tile.
    # w_ref: (D, D) folded weight; constant block index + Buffered(1) ->
    #        single resident copy in VMEM for the whole grid.
    # b_ref: (1, D) folded bias (f32).
    x = x_ref[...].astype(jnp.float32)

    # LayerNorm statistics in f32 (biased variance, eps inside rsqrt — matches
    # nn.LayerNorm).
    mean = jnp.mean(x, axis=-1, keepdims=True)
    cen = x - mean
    var = jnp.mean(cen * cen, axis=-1, keepdims=True)
    xn = cen * jax.lax.rsqrt(var + EPS)

    # gamma/beta were folded into W'/b' by the wrapper:  out = xn @ W' + b'.
    # Matmul in the weight dtype (bf16 MXU path on v6e/v7x), accumulate in f32.
    out = jnp.dot(xn.astype(w_ref.dtype), w_ref[...],
                  preferred_element_type=jnp.float32)
    out = out + b_ref[...].astype(jnp.float32)

    # norm_out = Identity()
    o_ref[...] = out.astype(o_ref.dtype)


def prenorm(x, gamma, beta, w_t, b, *, tm=1024, matmul_dtype=jnp.bfloat16):
    """PreNorm with fn = Linear(dim, dim).

    x: [B, S, D]; gamma/beta: [D] (LayerNorm affine); w_t: [D, D] (Linear
    weight, already transposed so we compute y @ w_t); b: [D].
    """
    B, S, D = x.shape
    N = B * S

    # Fold the LayerNorm affine into the linear layer (computed once, in f32):
    #   (xn * gamma + beta) @ W = xn @ (gamma[:, None] * W) + (beta @ W)
    w_f32 = w_t.astype(jnp.float32)
    w_fold = (gamma.astype(jnp.float32)[:, None] * w_f32).astype(matmul_dtype)
    b_fold = (beta.astype(jnp.float32) @ w_f32
              + b.astype(jnp.float32)).reshape(1, D)

    tm_eff, n_pad = _pick_tm(N, tm)

    x2 = x.reshape(N, D)
    if n_pad != N:
        # Fallback only (ragged N): padded zero rows normalize to 0, produce
        # finite values, and are sliced off below.
        x2 = jnp.pad(x2, ((0, n_pad - N), (0, 0)))

    # VMEM budget: double-buffered x/out tiles + single-buffered weight/bias.
    itemsize = jnp.dtype(x.dtype).itemsize
    x_bytes = tm_eff * D * itemsize
    out_bytes = tm_eff * D * itemsize
    w_bytes = D * D * jnp.dtype(matmul_dtype).itemsize
    vmem_need = 2 * (x_bytes + out_bytes) + w_bytes + D * 4

    # Cap with headroom for compiler-internal scratch: ~75% of physical VMEM
    # when queryable (v7x has only 64 MiB/TC), else a conservative 48 MiB.
    try:
        vmem_cap = int(pltpu.get_tpu_info().vmem_capacity_bytes * 3 // 4)
    except Exception:
        vmem_cap = 48 << 20
    vmem_limit = int(min(max(2 * vmem_need + (1 << 20), 16 << 20), vmem_cap))

    out2 = pl.pallas_call(
        prenorm_kernel,
        out_shape=jax.ShapeDtypeStruct((n_pad, D), x.dtype),
        grid_spec=pltpu.PrefetchScalarGridSpec(
            num_scalar_prefetch=0,
            grid=(n_pad // tm_eff,),
            in_specs=[
                pl.BlockSpec((tm_eff, D), lambda i: (i, 0)),       # x row tile
                pl.BlockSpec((D, D), lambda i: (0, 0),             # folded W
                             pipeline_mode=pl.Buffered(1)),        # resident, single-buffered
                pl.BlockSpec((1, D), lambda i: (0, 0),             # folded bias
                             pipeline_mode=pl.Buffered(1)),
            ],
            out_specs=pl.BlockSpec((tm_eff, D), lambda i: (i, 0)),
        ),
        compiler_params=pltpu.CompilerParams(
            dimension_semantics=("parallel",),
            vmem_limit_bytes=vmem_limit,
        ),
    )(x2, w_fold, b_fold)

    if n_pad != N:
        out2 = out2[:N]
    return out2.reshape(B, S, D)


def prenorm_ref(x, gamma, beta, w_t, b):
    xf = x.astype(jnp.float32)
    mean = jnp.mean(xf, axis=-1, keepdims=True)
    var = jnp.mean((xf - mean) ** 2, axis=-1, keepdims=True)
    xn = (xf - mean) * jax.lax.rsqrt(var + EPS)
    y = xn * gamma + beta
    return (y @ w_t + b).astype(x.dtype)


if __name__ == "__main__":
    key = jax.random.PRNGKey(0)

    def make_inputs(B, S, D, k):
        kx, kg, kb, kw, kbias = jax.random.split(k, 5)
        x = jax.random.normal(kx, (B, S, D), dtype=jnp.float32)
        # Deterministic synthetic parameters (not a checkpoint).
        gamma = 1.0 + 0.1 * jax.random.normal(kg, (D,), dtype=jnp.float32)
        beta = 0.1 * jax.random.normal(kb, (D,), dtype=jnp.float32)
        w_t = jax.random.normal(kw, (D, D), dtype=jnp.float32) / jnp.sqrt(D)
        b = 0.1 * jax.random.normal(kbias, (D,), dtype=jnp.float32)
        return x, gamma, beta, w_t, b

    D = 128  # lane-dense output store (no vst.msk)
    k1, k2, k3 = jax.random.split(key, 3)

    # Case 1: main shape — single full-array tile, no padding.
    B, S = 2, 8
    x, gamma, beta, w_t, b = make_inputs(B, S, D, k1)
    ref = prenorm_ref(x, gamma, beta, w_t, b)

    # Exact-precision path (f32 matmul) — tight tolerance.
    out_f32 = prenorm(x, gamma, beta, w_t, b, matmul_dtype=jnp.float32)
    jax.block_until_ready(out_f32)
    assert out_f32.shape == (B, S, D)
    assert jnp.allclose(out_f32, ref, atol=1e-4, rtol=1e-4), "f32 mismatch vs reference"

    # Default fast path (bf16 MXU matmul, f32 stats/accumulation) — loose tolerance.
    out_bf16 = prenorm(x, gamma, beta, w_t, b)
    jax.block_until_ready(out_bf16)
    assert out_bf16.shape == (B, S, D)
    assert jnp.allclose(out_bf16, ref, atol=5e-2, rtol=5e-2), "bf16 mismatch vs reference"

    # Case 2: multi-tile path — tile divides N exactly (no pad, no slice).
    x, gamma, beta, w_t, b = make_inputs(2, 40, D, k2)   # N = 80, tm=16 -> 5 tiles
    out = prenorm(x, gamma, beta, w_t, b, tm=16, matmul_dtype=jnp.float32)
    jax.block_until_ready(out)
    assert jnp.allclose(out, prenorm_ref(x, gamma, beta, w_t, b),
                        atol=1e-4, rtol=1e-4), "multi-tile mismatch vs reference"

    # Case 3: ragged fallback — N = 90 has no multiple-of-8 divisor -> pad path.
    x, gamma, beta, w_t, b = make_inputs(2, 45, D, k3)
    out = prenorm(x, gamma, beta, w_t, b, tm=32, matmul_dtype=jnp.float32)
    jax.block_until_ready(out)
    assert jnp.allclose(out, prenorm_ref(x, gamma, beta, w_t, b),
                        atol=1e-4, rtol=1e-4), "ragged-tail mismatch vs reference"

    print("KERNEL_OK")
</pallas_src>

<mosaic_0001>
module attributes {stable_mosaic.version = 11 : i64} {
  func.func @prenorm_kernel(%arg0: i32, %arg1: memref<16x128xf32, #tpu.memory_space<vmem>>, %arg2: memref<128x128xf32, #tpu.memory_space<vmem>>, %arg3: memref<1x128xf32, #tpu.memory_space<vmem>>, %arg4: memref<16x128xf32, #tpu.memory_space<vmem>>) attributes {dimension_semantics = [#tpu.dimension_semantics<parallel>], iteration_bounds = array<i64: 1>, scalar_prefetch = 0 : i64, scratch_operands = 0 : i64, tpu.core_type = #tpu.core_type<tc>, window_params = [{transform_indices = @transform_0, window_bounds = array<i64: 16, 128>}, {pipeline_mode = #tpu.pipeline_mode<synchronous>, transform_indices = @transform_1, window_bounds = array<i64: 128, 128>}, {pipeline_mode = #tpu.pipeline_mode<synchronous>, transform_indices = @transform_2, window_bounds = array<i64: 1, 128>}, {transform_indices = @transform_3, window_bounds = array<i64: 16, 128>}]} {
    %c0 = arith.constant 0 : index
    %c0_0 = arith.constant 0 : index
    %0 = vector.load %arg1[%c0, %c0_0] : memref<16x128xf32, #tpu.memory_space<vmem>>, vector<16x128xf32>
    %cst = arith.constant dense<0.000000e+00> : vector<16xf32>
    %1 = vector.multi_reduction <add>, %0, %cst [1] : vector<16x128xf32> to vector<16xf32>
    %2 = vector.shape_cast %1 : vector<16xf32> to vector<16x1xf32>
    %cst_1 = arith.constant 1.280000e+02 : f32
    %3 = vector.broadcast %cst_1 : f32 to vector<16x1xf32>
    %4 = arith.divf %2, %3 : vector<16x1xf32>
    %5 = vector.broadcast %4 : vector<16x1xf32> to vector<16x128xf32>
    %6 = arith.subf %0, %5 : vector<16x128xf32>
    %7 = arith.mulf %6, %6 : vector<16x128xf32>
    %cst_2 = arith.constant dense<0.000000e+00> : vector<16xf32>
    %8 = vector.multi_reduction <add>, %7, %cst_2 [1] : vector<16x128xf32> to vector<16xf32>
    %9 = vector.shape_cast %8 : vector<16xf32> to vector<16x1xf32>
    %cst_3 = arith.constant 1.280000e+02 : f32
    %10 = vector.broadcast %cst_3 : f32 to vector<16x1xf32>
    %11 = arith.divf %9, %10 : vector<16x1xf32>
    %cst_4 = arith.constant 9.99999974E-6 : f32
    %12 = vector.broadcast %cst_4 : f32 to vector<16x1xf32>
    %13 = arith.addf %11, %12 : vector<16x1xf32>
    %14 = math.rsqrt %13 : vector<16x1xf32>
    %15 = vector.broadcast %14 : vector<16x1xf32> to vector<16x128xf32>
    %16 = arith.mulf %6, %15 : vector<16x128xf32>
    %c0_5 = arith.constant 0 : index
    %c0_6 = arith.constant 0 : index
    %17 = vector.load %arg2[%c0_5, %c0_6] : memref<128x128xf32, #tpu.memory_space<vmem>>, vector<128x128xf32>
    %cst_7 = arith.constant dense<0.000000e+00> : vector<16x128xf32>
    %18 = tpu.matmul %16, %17, %cst_7 {dimension_numbers = #tpu.dot_dimension_numbers<[1], [0], [0], [1], [0, 0, 1, 1], [], []>} : vector<16x128xf32>, vector<128x128xf32>, vector<16x128xf32> -> vector<16x128xf32>
    %c0_8 = arith.constant 0 : index
    %c0_9 = arith.constant 0 : index
    %19 = vector.load %arg3[%c0_8, %c0_9] : memref<1x128xf32, #tpu.memory_space<vmem>>, vector<1x128xf32>
    %20 = vector.broadcast %19 : vector<1x128xf32> to vector<16x128xf32>
    %21 = arith.addf %18, %20 : vector<16x128xf32>
    %c0_10 = arith.constant 0 : index
    %c0_11 = arith.constant 0 : index
    %22 = vector.load %arg4[%c0_10, %c0_11] : memref<16x128xf32, #tpu.memory_space<vmem>>, vector<16x128xf32>
    tpu.vector_store %arg4[%c0_10, %c0_11], %21 {strides = array<i32>} : memref<16x128xf32, #tpu.memory_space<vmem>>, vector<16x128xf32>,
    return
  }
  func.func @transform_0(%arg0: i32) -> (i32, i32) {
    %c0_i32 = arith.constant 0 : i32
    %c0_i32_0 = arith.constant 0 : i32
    return %arg0, %c0_i32 : i32, i32
  }
  func.func @transform_1(%arg0: i32) -> (i32, i32) {
    %c0_i32 = arith.constant 0 : i32
    %c0_i32_0 = arith.constant 0 : i32
    %c0_i32_1 = arith.constant 0 : i32
    return %c0_i32, %c0_i32_0 : i32, i32
  }
  func.func @transform_2(%arg0: i32) -> (i32, i32) {
    %c0_i32 = arith.constant 0 : i32
    %c0_i32_0 = arith.constant 0 : i32
    %c0_i32_1 = arith.constant 0 : i32
    return %c0_i32, %c0_i32_0 : i32, i32
  }
  func.func @transform_3(%arg0: i32) -> (i32, i32) {
    %c0_i32 = arith.constant 0 : i32
    %c0_i32_0 = arith.constant 0 : i32
    return %arg0, %c0_i32 : i32, i32
  }
}

</mosaic_0001>

<llo_original>
// kernel: tpu_custom_call.1
$region0: #{tpu_custom_call.1}
  #allocation0 [shape = 'u32[]', space=smem, size = 0x4, offset = 0x4, fixed_abs, tag = 'smem constant byte address 0x4 - core index']
  #allocation1 [shape = 'u32[144,128]{1,0:T(1,128)}', space=vmem, size = 0x12000, scoped, tag = 'internal scratch']
  %s0 = inlined_call_operand.hbm [shape: f32[16,128], index: 0, kind: input, shape index: {}]
  %s1 = inlined_call_operand.hbm [shape: f32[128,128], index: 1, kind: input, shape index: {}]
  %s2 = inlined_call_operand.vmem [shape: f32[1,128], index: 2, kind: input, shape index: {}]
  %s3 = inlined_call_operand.hbm [shape: f32[16,128], index: 3, kind: output, shape index: {}]
  %s4 = sld [smem:[#allocation0]]
  $region30: #{tpu_custom_call.1} parent=0
    _
  %s6 = ssub.s32 1, %s4
  %s7 = scalar_select 0, %s6, %s4
  $region1: #{tpu_custom_call.1} parent=0
    #allocation2 [shape = 'u8[8192]{0}', space=vmem, size = 0x2000, scoped, tag = 'input window, operand 0, single buffered']
    #allocation3 [shape = 's32[1]{0}', space=sflag, size = 0x4, scoped, tag = 'scoped memory for tpu_custom_call.1']
    #allocation4 [shape = 's32[1]{0}', space=sflag, size = 0x4, scoped, tag = 'scoped memory for tpu_custom_call.1']
    #allocation5 [shape = 'u8[65536]{0}', space=vmem, size = 0x10000, scoped, tag = 'input window, operand 1, single buffered']
    #allocation6 [shape = 's32[1]{0}', space=sflag, size = 0x4, scoped, tag = 'scoped memory for tpu_custom_call.1']
    #allocation7 [shape = 'u8[8192]{0}', space=vmem, size = 0x2000, scoped, tag = 'output window, operand 0, single buffered']
    %8 = vsyncpa [#allocation3], 0
    %9 = vsyncpa [#allocation6], 0
    %10 = vsyncpa [#allocation4], 0
    // Predicated region
    $region2: #{tpu_custom_call.1} parent=1 // pred_check
      _
    $region3: #{tpu_custom_call.1} parent=1 // pred_check_branch
      %12 = sbr.rel (0) target = $region5
    $region4: #{tpu_custom_call.1} parent=1 // pred_region
      %s14 = ssub.s32 256, 256
      %15 = vsyncadd [#allocation3], %s14
      %s16 = sshll.u32 [#allocation2], 4
      %s17 = int_to_ptr.vmem [resolvable:$true] %s16
      %22 = dma.hbm_to_vmem [thread:$0]  %s0, 256, %s17, [#allocation3], 128, 128, 8
    $region5: #{tpu_custom_call.1} parent=1 // pred_fallthru
      _
    // Predicated region
    $region6: #{tpu_custom_call.1} parent=1 // pred_check
      _
    $region7: #{tpu_custom_call.1} parent=1 // pred_check_branch
      %24 = sbr.rel (0) target = $region9
    $region8: #{tpu_custom_call.1} parent=1 // pred_region
      %s26 = ssub.s32 2048, 2048
      %27 = vsyncadd [#allocation6], %s26
      %s28 = sshll.u32 [#allocation5], 4
      %s29 = int_to_ptr.vmem [resolvable:$true] %s28
      %34 = dma.hbm_to_vmem [thread:$0]  %s1, 2048, %s29, [#allocation6], 128, 128, 8
    $region9: #{tpu_custom_call.1} parent=1 // pred_fallthru
      _
    // Predicated region
    $region10: #{tpu_custom_call.1} parent=1 // pred_check
      _
    $region11: #{tpu_custom_call.1} parent=1 // pred_check_branch
      %36 = sbr.rel (0) target = $region13
    $region12: #{tpu_custom_call.1} parent=1 // pred_region
      _
    $region13: #{tpu_custom_call.1} parent=1 // pred_fallthru
      _
    // Predicated region
    $region14: #{tpu_custom_call.1} parent=1 // pred_check
      _
    $region15: #{tpu_custom_call.1} parent=1 // pred_check_branch
      %38 = sbr.rel (0) target = $region17
    $region16: #{tpu_custom_call.1} parent=1 // pred_region
      %39 = dma.done [#allocation3], 256
    $region17: #{tpu_custom_call.1} parent=1 // pred_fallthru
      _
    // Predicated region
    $region18: #{tpu_custom_call.1} parent=1 // pred_check
      _
    $region19: #{tpu_custom_call.1} parent=1 // pred_check_branch
      %41 = sbr.rel (0) target = $region21
    $region20: #{tpu_custom_call.1} parent=1 // pred_region
      %42 = dma.done [#allocation6], 2048
    $region21: #{tpu_custom_call.1} parent=1 // pred_fallthru
      _
    %v43 = vld [vmem:[#allocation2] sm:$0xff]
    %v44 = vld [vmem:[#allocation2 + $0x8] sm:$0xff]
    %45 = vadd.xlane.f32.xlu0 %v43
    %v46 = vpop.xlane.xlu0 %45
    %47 = vadd.xlane.f32.xlu0 %v44
    %v48 = vpop.xlane.xlu0 %47
    %v49 = vrcp.pop 128.0
    %v50 = vmul.f32 %v46, %v49
    %v51 = vmul.f32 %v48, %v49
    %v52 = vsub.f32 %v43, %v50
    %v53 = vsub.f32 %v44, %v51
    %v54 = vmul.f32 %v52, %v52
    %v55 = vmul.f32 %v53, %v53
    %56 = vadd.xlane.f32.xlu0 %v54
    %v57 = vpop.xlane.xlu0 %56
    %58 = vadd.xlane.f32.xlu0 %v55
    %v59 = vpop.xlane.xlu0 %58
    %v60 = vmul.f32 %v57, %v49
    %v61 = vmul.f32 %v59, %v49
    %v62 = vadd.f32 %v60, 1e-05
    %v63 = vadd.f32 %v61, 1e-05
    %v64 = vrsqrt.pop %v62
    %v65 = vrsqrt.pop %v63
    %v66 = vmul.f32 %v52, %v64
    %v67 = vmul.f32 %v53, %v65
    %v68 = vld [vmem:[#allocation5] sm:$0xff]
    %v69 = vld [vmem:[#allocation5 + $0x8] sm:$0xff]
    %v70 = vld [vmem:[#allocation5 + $0x10] sm:$0xff]
    %v71 = vld [vmem:[#allocation5 + $0x18] sm:$0xff]
    %v72 = vld [vmem:[#allocation5 + $0x20] sm:$0xff]
    %v73 = vld [vmem:[#allocation5 + $0x28] sm:$0xff]
    %v74 = vld [vmem:[#allocation5 + $0x30] sm:$0xff]
    %v75 = vld [vmem:[#allocation5 + $0x38] sm:$0xff]
    %v76 = vld [vmem:[#allocation5 + $0x40] sm:$0xff]
    %v77 = vld [vmem:[#allocation5 + $0x48] sm:$0xff]
    %v78 = vld [vmem:[#allocation5 + $0x50] sm:$0xff]
    %v79 = vld [vmem:[#allocation5 + $0x58] sm:$0xff]
    %v80 = vld [vmem:[#allocation5 + $0x60] sm:$0xff]
    %v81 = vld [vmem:[#allocation5 + $0x68] sm:$0xff]
    %v82 = vld [vmem:[#allocation5 + $0x70] sm:$0xff]
    %v83 = vld [vmem:[#allocation5 + $0x78] sm:$0xff]
    %v84 = vld [vmem:[%s2] sm:$0x1]
    %v86 = vlaneseq
    %v87 = vshrl.u32 %v86, 7
    %v88 = vsub.s32 0, %v87
    %v89 = vrot.slane %v84, %v88
    %91 = vmatprep.subr.mxu0 0.0
    %92 = vmatpush1.msra.mxu0 %v83
    %93 = vmatprep.subr.mxu0 0.0
    %94 = vmatpush1.msra.mxu0 %v82
    %95 = vmatprep.subr.mxu0 0.0
    %96 = vmatpush1.msra.mxu0 %v81
    %97 = vmatprep.subr.mxu0 0.0
    %98 = vmatpush1.msra.mxu0 %v80
    %99 = vmatprep.subr.mxu0 0.0
    %100 = vmatpush1.msra.mxu0 %v79
    %101 = vmatprep.subr.mxu0 0.0
    %102 = vmatpush1.msra.mxu0 %v78
    %103 = vmatprep.subr.mxu0 0.0
    %104 = vmatpush1.msra.mxu0 %v77
    %105 = vmatprep.subr.mxu0 0.0
    %106 = vmatpush1.msra.mxu0 %v76
    %107 = vmatprep.subr.mxu0 0.0
    %108 = vmatpush1.msra.mxu0 %v75
    %109 = vmatprep.subr.mxu0 0.0
    %110 = vmatpush1.msra.mxu0 %v74
    %111 = vmatprep.subr.mxu0 0.0
    %112 = vmatpush1.msra.mxu0 %v73
    %113 = vmatprep.subr.mxu0 0.0
    %114 = vmatpush1.msra.mxu0 %v72
    %115 = vmatprep.subr.mxu0 0.0
    %116 = vmatpush1.msra.mxu0 %v71
    %117 = vmatprep.subr.mxu0 0.0
    %118 = vmatpush1.msra.mxu0 %v70
    %119 = vmatprep.subr.mxu0 0.0
    %120 = vmatpush1.msra.mxu0 %v69
    %121 = vmatprep.subr.mxu0 0.0
    %122 = vmatpush1.msra.mxu0 %v68
    %123 = vmatprep.subr.mxu0 0.0
    %124 = vmatpush2.msra.mxu0 0.0
    %125 = vmatprep.subr.mxu0 0.0
    %126 = vmatpush2.msra.mxu0 0.0
    %127 = vmatprep.subr.mxu0 0.0
    %128 = vmatpush2.msra.mxu0 0.0
    %129 = vmatprep.subr.mxu0 0.0
    %130 = vmatpush2.msra.mxu0 0.0
    %131 = vmatprep.subr.mxu0 0.0
    %132 = vmatpush2.msra.mxu0 0.0
    %133 = vmatprep.subr.mxu0 0.0
    %134 = vmatpush2.msra.mxu0 0.0
    %135 = vmatprep.subr.mxu0 0.0
    %136 = vmatpush2.msra.mxu0 0.0
    %137 = vmatprep.subr.mxu0 0.0
    %138 = vmatpush2.msra.mxu0 0.0
    %139 = vmatprep.subr.mxu0 0.0
    %140 = vmatpush2.msra.mxu0 0.0
    %141 = vmatprep.subr.mxu0 0.0
    %142 = vmatpush2.msra.mxu0 0.0
    %143 = vmatprep.subr.mxu0 0.0
    %144 = vmatpush2.msra.mxu0 0.0
    %145 = vmatprep.subr.mxu0 0.0
    %146 = vmatpush2.msra.mxu0 0.0
    %147 = vmatprep.subr.mxu0 0.0
    %148 = vmatpush2.msra.mxu0 0.0
    %149 = vmatprep.subr.mxu0 0.0
    %150 = vmatpush2.msra.mxu0 0.0
    %151 = vmatprep.subr.mxu0 0.0
    %152 = vmatpush2.msra.mxu0 0.0
    %153 = vmatprep.subr.mxu0 0.0
    %154 = vmatpush2.msra.mxu0 0.0
    %155 = vmatprep.mubr.f32.mxu0 0.0
    %156 = vmatmul.mubr.f32.gmra.mxu0 %v66
    %v157 = vpop.f32.mrf.mxu0
    %v158 = vadd.f32 %v89, %v157
    %v159 = vpop.f32.mrf.mxu0
    %160 = vmatprep.mubr.f32.mxu0 0.0
    %161 = vmatmul.mubr.f32.gmra.mxu0 %v67
    %v162 = vpop.f32.mrf.mxu0
    %v163 = vadd.f32 %v89, %v162
    %v164 = vpop.f32.mrf.mxu0
    %165 = vdwg.mxu0
    %166 = vst [vmem:[#allocation7] sm:$0xff] %v158
    %167 = vst [vmem:[#allocation7 + $0x8] sm:$0xff] %v163
    // Predicated region
    $region22: #{tpu_custom_call.1} parent=1 // pred_check
      _
    $region23: #{tpu_custom_call.1} parent=1 // pred_check_branch
      %169 = sbr.rel (0) target = $region25
    $region24: #{tpu_custom_call.1} parent=1 // pred_region
      %s171 = ssub.s32 256, 256
      %172 = vsyncadd [#allocation4], %s171
      %s173 = sshll.u32 [#allocation7], 4
      %s174 = int_to_ptr.vmem [resolvable:$true] %s173
      %179 = dma.vmem_to_hbm [thread:$0]  %s174, 256, %s3, [#allocation4], 128, 128, 8
    $region25: #{tpu_custom_call.1} parent=1 // pred_fallthru
      _
    // Predicated region
    $region26: #{tpu_custom_call.1} parent=1 // pred_check
      _
    $region27: #{tpu_custom_call.1} parent=1 // pred_check_branch
      %181 = sbr.rel (0) target = $region29
    $region28: #{tpu_custom_call.1} parent=1 // pred_region
      %182 = dma.done [#allocation4], 256
    $region29: #{tpu_custom_call.1} parent=1 // pred_fallthru
      _
    %183 = vsyncpa [#allocation3], 1
    %184 = vsyncpa [#allocation6], 1
    %185 = vsyncpa [#allocation4], 1

</llo_original>
